<compile_context>
chip_gen: v5e
topology: v5e:2x2
jax: 0.10.0
libtpu: 0.0.40
codegen_flags: <defaults>
</compile_context>

<pallas_src>
import jax
import jax.numpy as jnp
from jax.experimental import pallas as pl
from jax.experimental.pallas import tpu as pltpu


def _hffn_kernel(x0_ref, x1_ref, x2_ref, x3_ref,
                 w0_ref, w1_ref, w2_ref, w3_ref,
                 o_ref):
    # out_tile (Cout, thw) = sum_i  W_fused_i (Cout, Cin_i) @ x_i (Cin_i, thw)
    acc = jnp.dot(w0_ref[...], x0_ref[...], preferred_element_type=jnp.float32)
    acc = acc + jnp.dot(w1_ref[...], x1_ref[...], preferred_element_type=jnp.float32)
    acc = acc + jnp.dot(w2_ref[...], x2_ref[...], preferred_element_type=jnp.float32)
    acc = acc + jnp.dot(w3_ref[...], x3_ref[...], preferred_element_type=jnp.float32)
    o_ref[...] = acc.astype(o_ref.dtype)


def _select_spatial_tile(HW, N, max_tile):
    """Pick the lane-axis (spatial) tile.

    Prefers the largest multiple of 128 that divides HW exactly (no ragged
    tail, fully unmasked lane stores), capped at max_tile.  When N == 1 it
    keeps >=2 spatial tiles so the 'parallel' grid feeds both v7x TensorCores.
    If HW has no 128-multiple divisor, the last block is simply partial
    (Pallas masks boundary blocks) -- no HBM-side padding is ever done.
    """
    if HW <= 128:
        return HW                                   # full (tiny) map, one block
    cap = max(128, (min(max_tile, HW) // 128) * 128)
    for t in range(cap, 127, -128):                 # multiples of 128, largest first
        if HW % t != 0:
            continue
        if N == 1 and HW // t < 2:
            continue                                # keep 2 grid steps (v7x megacore)
        return t
    # Ragged HW: partial last block handled by Pallas boundary masking.
    t = cap
    if N == 1 and t >= HW:
        t = max(128, ((HW // 2) // 128) * 128)
    return t


def hffn_pallas(features_nchw, fpn_weights, conv_weight, *,
                max_tile=4096, out_dtype=None, interpret=False):
    """features_nchw: list of 4 NCHW arrays (same N,H,W, varying C).
    fpn_weights[i]: (Cout, Cin_i, 1, 1)   (PyTorch conv weight layout)
    conv_weight:    (Cout, 4*Cout, 1, 1)
    Compute happens in the features' dtype (f32 accumulation on the MXU);
    output dtype defaults to the input dtype.  Returns NCHW (N, Cout, H, W)."""
    assert len(features_nchw) == 4 and len(fpn_weights) == 4
    N, _, H, W = features_nchw[0].shape
    Cout = fpn_weights[0].shape[0]
    HW = H * W
    in_dtype = features_nchw[0].dtype
    out_dtype = in_dtype if out_dtype is None else out_dtype

    # ---- fold the fuse conv into the per-level weights (tiny matmuls, f32) ----
    wc = conv_weight[:, :, 0, 0].astype(jnp.float32)                  # (Cout, 4*Cout)
    w_fused = [
        jnp.dot(wc[:, i * Cout:(i + 1) * Cout],
                fpn_weights[i][:, :, 0, 0].astype(jnp.float32)        # (Cout, Cin_i)
                ).astype(in_dtype)
        for i in range(4)
    ]

    # ---- lane-dense layout: pure reshapes only (no cast, no pad) ----
    xs = [f.reshape(N, f.shape[1], HW) for f in features_nchw]
    cins = [x.shape[1] for x in xs]

    thw = _select_spatial_tile(HW, N, max_tile)
    grid = (N, pl.cdiv(HW, thw))

    in_item = jnp.dtype(in_dtype).itemsize
    out_item = jnp.dtype(out_dtype).itemsize

    # Memory-bound cost hint for XLA's scheduler.
    bytes_accessed = (N * HW * sum(cins) * in_item
                      + Cout * sum(cins) * in_item
                      + N * HW * Cout * out_item)
    flops = 2 * N * HW * Cout * sum(cins)
    cost = pl.CostEstimate(flops=flops, transcendentals=0,
                           bytes_accessed=bytes_accessed)

    # Scoped-VMEM limit: double-buffered per-step working set with headroom,
    # capped at 48 MiB so a big-tile config never exceeds v7x's 64 MiB VMEM
    # (and still lifts v5e's 16 MiB default when tiles grow).
    per_step = (sum(cins) * thw * in_item * 2          # input tiles, double-buffered
                + Cout * thw * out_item * 2            # output tile, double-buffered
                + Cout * sum(cins) * in_item)          # fused weights (tiny)
    vmem_limit = int(min(max(4 * per_step + (2 << 20), 16 << 20), 48 << 20))

    def x_spec(c):
        # squeezed batch dim; kernel sees (Cin_i, thw)
        return pl.BlockSpec((None, c, thw), lambda n, t: (n, 0, t))

    def w_spec(c):
        # full tiny weight, replicated across the grid
        return pl.BlockSpec((Cout, c), lambda n, t: (0, 0))

    out = pl.pallas_call(
        _hffn_kernel,
        out_shape=jax.ShapeDtypeStruct((N, Cout, HW), out_dtype),
        grid=grid,
        in_specs=[*(x_spec(c) for c in cins), *(w_spec(c) for c in cins)],
        out_specs=pl.BlockSpec((None, Cout, thw), lambda n, t: (n, 0, t)),
        compiler_params=pltpu.CompilerParams(
            dimension_semantics=("parallel", "parallel"),
            vmem_limit_bytes=vmem_limit),
        cost_estimate=cost,
        interpret=interpret,
    )(*xs, *w_fused)

    return out.reshape(N, Cout, H, W)


def hffn_reference(features_nchw, fpn_weights, conv_weight):
    """Pure-JAX reference reproducing the PyTorch forward (full precision)."""
    hp = jax.lax.Precision.HIGHEST
    fpn_out = [jnp.einsum('nchw,oc->nohw', f.astype(jnp.float32),
                          w[:, :, 0, 0], precision=hp)
               for f, w in zip(features_nchw, fpn_weights)]
    fused = jnp.concatenate(fpn_out, axis=1)
    return jnp.einsum('nchw,oc->nohw', fused, conv_weight[:, :, 0, 0], precision=hp)


if __name__ == "__main__":
    key = jax.random.PRNGKey(0)
    in_channels = [4, 8, 16, 32]
    out_channels = 8
    N, H, W = 2, 32, 32

    keys = jax.random.split(key, 2 * len(in_channels) + 1)
    features = [jax.random.normal(keys[i], (N, in_channels[i], H, W),
                                  dtype=jnp.float32)
                for i in range(len(in_channels))]
    fpn_weights = [
        0.1 * jax.random.normal(keys[len(in_channels) + i],
                                (out_channels, in_channels[i], 1, 1),
                                dtype=jnp.float32)
        for i in range(len(in_channels))]
    conv_weight = 0.1 * jax.random.normal(
        keys[-1], (out_channels, out_channels * 4, 1, 1), dtype=jnp.float32)

    ref = hffn_reference(features, fpn_weights, conv_weight)

    # f32 path (tight check; fused-weight reassociation only)
    out_f32 = hffn_pallas(features, fpn_weights, conv_weight)
    out_f32 = jax.block_until_ready(out_f32)
    assert out_f32.shape == (N, out_channels, H, W)
    assert out_f32.dtype == jnp.float32
    assert jnp.allclose(out_f32, ref, atol=1e-3, rtol=1e-3)

    # bf16-upstream fast path: features already bf16 in HBM, bf16 out, f32 accum
    feats_bf16 = [f.astype(jnp.bfloat16) for f in features]
    out_bf16 = hffn_pallas(feats_bf16, fpn_weights, conv_weight)
    out_bf16 = jax.block_until_ready(out_bf16)
    assert out_bf16.shape == (N, out_channels, H, W)
    assert out_bf16.dtype == jnp.bfloat16
    assert jnp.allclose(out_bf16.astype(jnp.float32), ref, atol=3e-2, rtol=3e-2)

    # ragged-spatial path (HW not a multiple of 128, N=1): partial last block,
    # no HBM-side padding or output slice
    H2, W2 = 20, 20
    feats_r = [jax.random.normal(keys[i], (1, in_channels[i], H2, W2),
                                 dtype=jnp.float32)
               for i in range(len(in_channels))]
    ref_r = hffn_reference(feats_r, fpn_weights, conv_weight)
    out_r = jax.block_until_ready(hffn_pallas(feats_r, fpn_weights, conv_weight))
    assert out_r.shape == (1, out_channels, H2, W2)
    assert jnp.allclose(out_r, ref_r, atol=1e-3, rtol=1e-3)

    print("KERNEL_OK")
</pallas_src>

<mosaic_0001>
module attributes {stable_mosaic.version = 11 : i64} {
  func.func @_hffn_kernel(%arg0: i32, %arg1: i32, %arg2: memref<1x4x1024xf32, #tpu.memory_space<vmem>>, %arg3: memref<1x8x1024xf32, #tpu.memory_space<vmem>>, %arg4: memref<1x16x1024xf32, #tpu.memory_space<vmem>>, %arg5: memref<1x32x1024xf32, #tpu.memory_space<vmem>>, %arg6: memref<8x4xf32, #tpu.memory_space<vmem>>, %arg7: memref<8x8xf32, #tpu.memory_space<vmem>>, %arg8: memref<8x16xf32, #tpu.memory_space<vmem>>, %arg9: memref<8x32xf32, #tpu.memory_space<vmem>>, %arg10: memref<1x8x1024xf32, #tpu.memory_space<vmem>>) attributes {dimension_semantics = [#tpu.dimension_semantics<parallel>, #tpu.dimension_semantics<parallel>], iteration_bounds = array<i64: 2, 1>, scalar_prefetch = 0 : i64, scratch_operands = 0 : i64, tpu.core_type = #tpu.core_type<tc>, window_params = [{transform_indices = @transform_0, window_bounds = array<i64: 1, 4, 1024>}, {transform_indices = @transform_1, window_bounds = array<i64: 1, 8, 1024>}, {transform_indices = @transform_2, window_bounds = array<i64: 1, 16, 1024>}, {transform_indices = @transform_3, window_bounds = array<i64: 1, 32, 1024>}, {pipeline_mode = #tpu.pipeline_mode<synchronous>, transform_indices = @transform_4, window_bounds = array<i64: 8, 4>}, {pipeline_mode = #tpu.pipeline_mode<synchronous>, transform_indices = @transform_5, window_bounds = array<i64: 8, 8>}, {pipeline_mode = #tpu.pipeline_mode<synchronous>, transform_indices = @transform_6, window_bounds = array<i64: 8, 16>}, {pipeline_mode = #tpu.pipeline_mode<synchronous>, transform_indices = @transform_7, window_bounds = array<i64: 8, 32>}, {transform_indices = @transform_8, window_bounds = array<i64: 1, 8, 1024>}]} {
    %c0 = arith.constant 0 : index
    %c0_0 = arith.constant 0 : index
    %0 = vector.load %arg6[%c0, %c0_0] : memref<8x4xf32, #tpu.memory_space<vmem>>, vector<8x4xf32>
    %c0_1 = arith.constant 0 : index
    %c0_2 = arith.constant 0 : index
    %c0_3 = arith.constant 0 : index
    %1 = vector.load %arg2[%c0_1, %c0_2, %c0_3] : memref<1x4x1024xf32, #tpu.memory_space<vmem>>, vector<1x4x1024xf32>
    %2 = vector.shape_cast %1 : vector<1x4x1024xf32> to vector<4x1024xf32>
    %cst = arith.constant dense<0.000000e+00> : vector<8x1024xf32>
    %3 = tpu.matmul %0, %2, %cst {dimension_numbers = #tpu.dot_dimension_numbers<[1], [0], [0], [1], [0, 0, 1, 1], [], []>} : vector<8x4xf32>, vector<4x1024xf32>, vector<8x1024xf32> -> vector<8x1024xf32>
    %c0_4 = arith.constant 0 : index
    %c0_5 = arith.constant 0 : index
    %4 = vector.load %arg7[%c0_4, %c0_5] : memref<8x8xf32, #tpu.memory_space<vmem>>, vector<8x8xf32>
    %c0_6 = arith.constant 0 : index
    %c0_7 = arith.constant 0 : index
    %c0_8 = arith.constant 0 : index
    %5 = vector.load %arg3[%c0_6, %c0_7, %c0_8] : memref<1x8x1024xf32, #tpu.memory_space<vmem>>, vector<1x8x1024xf32>
    %6 = vector.shape_cast %5 : vector<1x8x1024xf32> to vector<8x1024xf32>
    %cst_9 = arith.constant dense<0.000000e+00> : vector<8x1024xf32>
    %7 = tpu.matmul %4, %6, %cst_9 {dimension_numbers = #tpu.dot_dimension_numbers<[1], [0], [0], [1], [0, 0, 1, 1], [], []>} : vector<8x8xf32>, vector<8x1024xf32>, vector<8x1024xf32> -> vector<8x1024xf32>
    %8 = arith.addf %3, %7 : vector<8x1024xf32>
    %c0_10 = arith.constant 0 : index
    %c0_11 = arith.constant 0 : index
    %9 = vector.load %arg8[%c0_10, %c0_11] : memref<8x16xf32, #tpu.memory_space<vmem>>, vector<8x16xf32>
    %c0_12 = arith.constant 0 : index
    %c0_13 = arith.constant 0 : index
    %c0_14 = arith.constant 0 : index
    %10 = vector.load %arg4[%c0_12, %c0_13, %c0_14] : memref<1x16x1024xf32, #tpu.memory_space<vmem>>, vector<1x16x1024xf32>
    %11 = vector.shape_cast %10 : vector<1x16x1024xf32> to vector<16x1024xf32>
    %cst_15 = arith.constant dense<0.000000e+00> : vector<8x1024xf32>
    %12 = tpu.matmul %9, %11, %cst_15 {dimension_numbers = #tpu.dot_dimension_numbers<[1], [0], [0], [1], [0, 0, 1, 1], [], []>} : vector<8x16xf32>, vector<16x1024xf32>, vector<8x1024xf32> -> vector<8x1024xf32>
    %13 = arith.addf %8, %12 : vector<8x1024xf32>
    %c0_16 = arith.constant 0 : index
    %c0_17 = arith.constant 0 : index
    %14 = vector.load %arg9[%c0_16, %c0_17] : memref<8x32xf32, #tpu.memory_space<vmem>>, vector<8x32xf32>
    %c0_18 = arith.constant 0 : index
    %c0_19 = arith.constant 0 : index
    %c0_20 = arith.constant 0 : index
    %15 = vector.load %arg5[%c0_18, %c0_19, %c0_20] : memref<1x32x1024xf32, #tpu.memory_space<vmem>>, vector<1x32x1024xf32>
    %16 = vector.shape_cast %15 : vector<1x32x1024xf32> to vector<32x1024xf32>
    %cst_21 = arith.constant dense<0.000000e+00> : vector<8x1024xf32>
    %17 = tpu.matmul %14, %16, %cst_21 {dimension_numbers = #tpu.dot_dimension_numbers<[1], [0], [0], [1], [0, 0, 1, 1], [], []>} : vector<8x32xf32>, vector<32x1024xf32>, vector<8x1024xf32> -> vector<8x1024xf32>
    %18 = arith.addf %13, %17 : vector<8x1024xf32>
    %c0_22 = arith.constant 0 : index
    %c0_23 = arith.constant 0 : index
    %c0_24 = arith.constant 0 : index
    %19 = vector.load %arg10[%c0_22, %c0_23, %c0_24] : memref<1x8x1024xf32, #tpu.memory_space<vmem>>, vector<1x8x1024xf32>
    %20 = vector.shape_cast %19 : vector<1x8x1024xf32> to vector<8x1024xf32>
    %21 = vector.shape_cast %18 : vector<8x1024xf32> to vector<1x8x1024xf32>
    tpu.vector_store %arg10[%c0_22, %c0_23, %c0_24], %21 {strides = array<i32>} : memref<1x8x1024xf32, #tpu.memory_space<vmem>>, vector<1x8x1024xf32>,
    return
  }
  func.func @transform_0(%arg0: i32, %arg1: i32) -> (i32, i32, i32) {
    %c0_i32 = arith.constant 0 : i32
    %c0_i32_0 = arith.constant 0 : i32
    return %arg0, %c0_i32, %arg1 : i32, i32, i32
  }
  func.func @transform_1(%arg0: i32, %arg1: i32) -> (i32, i32, i32) {
    %c0_i32 = arith.constant 0 : i32
    %c0_i32_0 = arith.constant 0 : i32
    return %arg0, %c0_i32, %arg1 : i32, i32, i32
  }
  func.func @transform_2(%arg0: i32, %arg1: i32) -> (i32, i32, i32) {
    %c0_i32 = arith.constant 0 : i32
    %c0_i32_0 = arith.constant 0 : i32
    return %arg0, %c0_i32, %arg1 : i32, i32, i32
  }
  func.func @transform_3(%arg0: i32, %arg1: i32) -> (i32, i32, i32) {
    %c0_i32 = arith.constant 0 : i32
    %c0_i32_0 = arith.constant 0 : i32
    return %arg0, %c0_i32, %arg1 : i32, i32, i32
  }
  func.func @transform_4(%arg0: i32, %arg1: i32) -> (i32, i32) {
    %c0_i32 = arith.constant 0 : i32
    %c0_i32_0 = arith.constant 0 : i32
    %c0_i32_1 = arith.constant 0 : i32
    return %c0_i32, %c0_i32_0 : i32, i32
  }
  func.func @transform_5(%arg0: i32, %arg1: i32) -> (i32, i32) {
    %c0_i32 = arith.constant 0 : i32
    %c0_i32_0 = arith.constant 0 : i32
    %c0_i32_1 = arith.constant 0 : i32
    return %c0_i32, %c0_i32_0 : i32, i32
  }
  func.func @transform_6(%arg0: i32, %arg1: i32) -> (i32, i32) {
    %c0_i32 = arith.constant 0 : i32
    %c0_i32_0 = arith.constant 0 : i32
    %c0_i32_1 = arith.constant 0 : i32
    return %c0_i32, %c0_i32_0 : i32, i32
  }
  func.func @transform_7(%arg0: i32, %arg1: i32) -> (i32, i32) {
    %c0_i32 = arith.constant 0 : i32
    %c0_i32_0 = arith.constant 0 : i32
    %c0_i32_1 = arith.constant 0 : i32
    return %c0_i32, %c0_i32_0 : i32, i32
  }
  func.func @transform_8(%arg0: i32, %arg1: i32) -> (i32, i32, i32) {
    %c0_i32 = arith.constant 0 : i32
    %c0_i32_0 = arith.constant 0 : i32
    return %arg0, %c0_i32, %arg1 : i32, i32, i32
  }
}

</mosaic_0001>

<llo_original>
// kernel: tpu_custom_call.1
$region0: #{tpu_custom_call.1}
  #allocation0 [shape = 'u32[]', space=smem, size = 0x4, offset = 0x4, fixed_abs, tag = 'smem constant byte address 0x4 - core index']
  #allocation1 [shape = 'u32[72,128]{1,0:T(1,128)}', space=vmem, size = 0x9000, scoped, tag = 'internal scratch']
  %s0 = inlined_call_operand.hbm [shape: f32[2,4,1024], index: 0, kind: input, shape index: {}]
  %s1 = inlined_call_operand.hbm [shape: f32[2,8,1024], index: 1, kind: input, shape index: {}]
  %s2 = inlined_call_operand.hbm [shape: f32[2,16,1024], index: 2, kind: input, shape index: {}]
  %s3 = inlined_call_operand.hbm [shape: f32[2,32,1024], index: 3, kind: input, shape index: {}]
  %s4 = inlined_call_operand.vmem [shape: f32[8,4], index: 4, kind: input, shape index: {}]
  %s5 = inlined_call_operand.vmem [shape: f32[8,8], index: 5, kind: input, shape index: {}]
  %s6 = inlined_call_operand.vmem [shape: f32[8,16], index: 6, kind: input, shape index: {}]
  %s7 = inlined_call_operand.hbm [shape: f32[8,32], index: 7, kind: input, shape index: {}]
  %s8 = inlined_call_operand.hbm [shape: f32[2,8,1024], index: 8, kind: output, shape index: {}]
  %s9 = sld [smem:[#allocation0]]
  $region85: #{tpu_custom_call.1} parent=0
    _
  %s11 = ssub.s32 1, %s9
  %s12 = scalar_select 0, %s11, %s9
  $region1: #{tpu_custom_call.1} parent=0
    #allocation2 [shape = 'u8[32768]{0}', space=vmem, size = 0x8000, scoped, tag = 'input window, operand 0']
    #allocation3 [shape = 's32[2]{0}', space=sflag, size = 0x8, scoped, tag = 'scoped memory for tpu_custom_call.1']
    #allocation4 [shape = 's32[2]{0}', space=sflag, size = 0x8, scoped, tag = 'scoped memory for tpu_custom_call.1']
    #allocation5 [shape = 'u8[65536]{0}', space=vmem, size = 0x10000, scoped, tag = 'input window, operand 1']
    #allocation6 [shape = 's32[2]{0}', space=sflag, size = 0x8, scoped, tag = 'scoped memory for tpu_custom_call.1']
    #allocation7 [shape = 'u8[131072]{0}', space=vmem, size = 0x20000, scoped, tag = 'input window, operand 2']
    #allocation8 [shape = 'u8[262144]{0}', space=vmem, size = 0x40000, scoped, tag = 'input window, operand 3']
    #allocation9 [shape = 's32[2]{0}', space=sflag, size = 0x8, scoped, tag = 'scoped memory for tpu_custom_call.1']
    #allocation10 [shape = 'u8[4096]{0}', space=vmem, size = 0x1000, scoped, tag = 'input window, operand 7, single buffered']
    #allocation11 [shape = 'u8[65536]{0}', space=vmem, size = 0x10000, scoped, tag = 'output window, operand 0']
    %13 = vsyncpa [#allocation3], 0
    %s14 = scalar_lea.sflag [#allocation3], 1
    %15 = vsyncpa %s14, 0
    %16 = vsyncpa [#allocation6], 0
    %s17 = scalar_lea.sflag [#allocation6], 1
    %18 = vsyncpa %s17, 0
    %19 = vsyncpa [#allocation9], 0
    %s20 = scalar_lea.sflag [#allocation9], 1
    %21 = vsyncpa %s20, 0
    %22 = vsyncpa [#allocation4], 0
    %s23 = scalar_lea.sflag [#allocation4], 1
    %24 = vsyncpa %s23, 0
    loop: start=0, step=1, limit=4
    $region2: #{tpu_custom_call.1} parent=1 // loop_pre_header
      _
    $region3: #{tpu_custom_call.1} parent=1 // loop_header
      %s26 = sphi 0, %s30
      %p27 = scmp.ge.s32.totalorder %s26, 4
      %s33 = sphi 0, %s45
      %s34 = sphi 0, %s41
      %s35 = sphi 0, %s33
      %s36 = sphi 0, %s34
      %s37 = sphi 0, %s35
      %s38 = sphi 0, %s36
      %s50 = sphi 0, %s52
      %s53 = sphi 0, %s50
      %s54 = sphi 0, %s53
      %s70 = sphi 0, %s54
      %s78 = sphi 0, %s80
      %s81 = sphi 0, %s78
      %s82 = sphi 0, %s81
      %s98 = sphi 0, %s82
      %s106 = sphi 0, %s108
      %s109 = sphi 0, %s106
      %s110 = sphi 0, %s109
      %s126 = sphi 0, %s110
      %s134 = sphi 0, %s136
      %s137 = sphi 0, %s134
      %s138 = sphi 0, %s137
      %s154 = sphi 0, %s138
      %s158 = sphi 0, %s158
      %s160 = sphi 0, %s158
      %s161 = sphi 0, %s160
      %s175 = sphi 0, %s161
      %s179 = sphi 0, %s179
      %s181 = sphi 0, %s179
      %s182 = sphi 0, %s181
      %s196 = sphi 0, %s182
      %s200 = sphi 0, %s200
      %s202 = sphi 0, %s200
      %s203 = sphi 0, %s202
      %s217 = sphi 0, %s203
      %s221 = sphi 0, %s221
      %s223 = sphi 0, %s221
      %s224 = sphi 0, %s223
      %s238 = sphi 0, %s224
      %s246 = sphi 0, %s248
      %s249 = sphi 0, %s246
      %s250 = sphi 0, %s249
      %s266 = sphi 0, %s250
    $region4: #{tpu_custom_call.1} parent=1 // loop_header_branch
      %29 = sbr.rel (%p27) target = $region8
    $region5: #{tpu_custom_call.1} parent=1 // loop_body
      %s31 = ssub.s32 %s26, 1
      %s32 = ssub.s32 %s26, 2
      %s39 = sadd.s32 1, %s34
      %p40 = scmp.ge.s32.totalorder %s39, 1
      %s41 = scalar_select %p40, 0, %s39
      %s42 = sadd.s32 1, %s33
      %s43 = scalar_select %p40, %s42, %s33
      %p44 = scmp.ge.s32.totalorder %s43, 2
      %s45 = scalar_select %p44, 0, %s43
      %s46 = ssub.s32 %s33, %s45
      %s47 = ssub.s32 %s34, %s41
      %s48 = sor.u32 %s46, %s47
      %p49 = scmp.eq.s32.totalorder %s48, 0
      %s51 = sadd.s32 %s50, 1
      %s52 = scalar_select %p49, %s50, %s51
      %p55 = pneg %p49
      %p56 = scmp.eq.s32.totalorder %s26, 1
      %p57 = por %p55, %p56
      %p58 = scmp.ne.s32.totalorder %s50, %s53
      %p59 = scmp.eq.s32.totalorder %s26, 0
      %p60 = por %p58, %p59
      %p61 = scmp.ne.s32.totalorder %s50, %s53
      %p62 = scmp.eq.s32.totalorder %s31, 1
      %p63 = por %p61, %p62
      %p64 = scmp.ne.s32.totalorder %s53, %s54
      %p65 = scmp.eq.s32.totalorder %s31, 0
      %p66 = por %p64, %p65
      %p67 = scmp.ne.s32.totalorder %s53, %s54
      %p68 = scmp.eq.s32.totalorder %s32, 1
      %p69 = por %p67, %p68
      %p71 = scmp.ne.s32.totalorder %s54, %s70
      %p72 = scmp.eq.s32.totalorder %s32, 0
      %p73 = por %p71, %p72
      %s74 = ssub.s32 %s33, %s45
      %s75 = ssub.s32 %s34, %s41
      %s76 = sor.u32 %s74, %s75
      %p77 = scmp.eq.s32.totalorder %s76, 0
      %s79 = sadd.s32 %s78, 1
      %s80 = scalar_select %p77, %s78, %s79
      %p83 = pneg %p77
      %p84 = scmp.eq.s32.totalorder %s26, 1
      %p85 = por %p83, %p84
      %p86 = scmp.ne.s32.totalorder %s78, %s81
      %p87 = scmp.eq.s32.totalorder %s26, 0
      %p88 = por %p86, %p87
      %p89 = scmp.ne.s32.totalorder %s78, %s81
      %p90 = scmp.eq.s32.totalorder %s31, 1
      %p91 = por %p89, %p90
      %p92 = scmp.ne.s32.totalorder %s81, %s82
      %p93 = scmp.eq.s32.totalorder %s31, 0
      %p94 = por %p92, %p93
      %p95 = scmp.ne.s32.totalorder %s81, %s82
      %p96 = scmp.eq.s32.totalorder %s32, 1
      %p97 = por %p95, %p96
      %p99 = scmp.ne.s32.totalorder %s82, %s98
      %p100 = scmp.eq.s32.totalorder %s32, 0
      %p101 = por %p99, %p100
      %s102 = ssub.s32 %s33, %s45
      %s103 = ssub.s32 %s34, %s41
      %s104 = sor.u32 %s102, %s103
      %p105 = scmp.eq.s32.totalorder %s104, 0
      %s107 = sadd.s32 %s106, 1
      %s108 = scalar_select %p105, %s106, %s107
      %p111 = pneg %p105
      %p112 = scmp.eq.s32.totalorder %s26, 1
      %p113 = por %p111, %p112
      %p114 = scmp.ne.s32.totalorder %s106, %s109
      %p115 = scmp.eq.s32.totalorder %s26, 0
      %p116 = por %p114, %p115
      %p117 = scmp.ne.s32.totalorder %s106, %s109
      %p118 = scmp.eq.s32.totalorder %s31, 1
      %p119 = por %p117, %p118
      %p120 = scmp.ne.s32.totalorder %s109, %s110
      %p121 = scmp.eq.s32.totalorder %s31, 0
      %p122 = por %p120, %p121
      %p123 = scmp.ne.s32.totalorder %s109, %s110
      %p124 = scmp.eq.s32.totalorder %s32, 1
      %p125 = por %p123, %p124
      %p127 = scmp.ne.s32.totalorder %s110, %s126
      %p128 = scmp.eq.s32.totalorder %s32, 0
      %p129 = por %p127, %p128
      %s130 = ssub.s32 %s33, %s45
      %s131 = ssub.s32 %s34, %s41
      %s132 = sor.u32 %s130, %s131
      %p133 = scmp.eq.s32.totalorder %s132, 0
      %s135 = sadd.s32 %s134, 1
      %s136 = scalar_select %p133, %s134, %s135
      %p139 = pneg %p133
      %p140 = scmp.eq.s32.totalorder %s26, 1
      %p141 = por %p139, %p140
      %p142 = scmp.ne.s32.totalorder %s134, %s137
      %p143 = scmp.eq.s32.totalorder %s26, 0
      %p144 = por %p142, %p143
      %p145 = scmp.ne.s32.totalorder %s134, %s137
      %p146 = scmp.eq.s32.totalorder %s31, 1
      %p147 = por %p145, %p146
      %p148 = scmp.ne.s32.totalorder %s137, %s138
      %p149 = scmp.eq.s32.totalorder %s31, 0
      %p150 = por %p148, %p149
      %p151 = scmp.ne.s32.totalorder %s137, %s138
      %p152 = scmp.eq.s32.totalorder %s32, 1
      %p153 = por %p151, %p152
      %p155 = scmp.ne.s32.totalorder %s138, %s154
      %p156 = scmp.eq.s32.totalorder %s32, 0
      %p157 = por %p155, %p156
      %s159 = sadd.s32 %s158, 1
      %p162 = scmp.eq.s32.totalorder %s26, 1
      %p163 = scmp.ne.s32.totalorder %s158, %s160
      %p164 = scmp.eq.s32.totalorder %s26, 0
      %p165 = por %p163, %p164
      %p166 = scmp.ne.s32.totalorder %s158, %s160
      %p167 = scmp.eq.s32.totalorder %s31, 1
      %p168 = por %p166, %p167
      %p169 = scmp.ne.s32.totalorder %s160, %s161
      %p170 = scmp.eq.s32.totalorder %s31, 0
      %p171 = por %p169, %p170
      %p172 = scmp.ne.s32.totalorder %s160, %s161
      %p173 = scmp.eq.s32.totalorder %s32, 1
      %p174 = por %p172, %p173
      %p176 = scmp.ne.s32.totalorder %s161, %s175
      %p177 = scmp.eq.s32.totalorder %s32, 0
      %p178 = por %p176, %p177
      %s180 = sadd.s32 %s179, 1
      %p183 = scmp.eq.s32.totalorder %s26, 1
      %p184 = scmp.ne.s32.totalorder %s179, %s181
      %p185 = scmp.eq.s32.totalorder %s26, 0
      %p186 = por %p184, %p185
      %p187 = scmp.ne.s32.totalorder %s179, %s181
      %p188 = scmp.eq.s32.totalorder %s31, 1
      %p189 = por %p187, %p188
      %p190 = scmp.ne.s32.totalorder %s181, %s182
      %p191 = scmp.eq.s32.totalorder %s31, 0
      %p192 = por %p190, %p191
      %p193 = scmp.ne.s32.totalorder %s181, %s182
      %p194 = scmp.eq.s32.totalorder %s32, 1
      %p195 = por %p193, %p194
      %p197 = scmp.ne.s32.totalorder %s182, %s196
      %p198 = scmp.eq.s32.totalorder %s32, 0
      %p199 = por %p197, %p198
      %s201 = sadd.s32 %s200, 1
      %p204 = scmp.eq.s32.totalorder %s26, 1
      %p205 = scmp.ne.s32.totalorder %s200, %s202
      %p206 = scmp.eq.s32.totalorder %s26, 0
      %p207 = por %p205, %p206
      %p208 = scmp.ne.s32.totalorder %s200, %s202
      %p209 = scmp.eq.s32.totalorder %s31, 1
      %p210 = por %p208, %p209
      %p211 = scmp.ne.s32.totalorder %s202, %s203
      %p212 = scmp.eq.s32.totalorder %s31, 0
      %p213 = por %p211, %p212
      %p214 = scmp.ne.s32.totalorder %s202, %s203
      %p215 = scmp.eq.s32.totalorder %s32, 1
      %p216 = por %p214, %p215
      %p218 = scmp.ne.s32.totalorder %s203, %s217
      %p219 = scmp.eq.s32.totalorder %s32, 0
      %p220 = por %p218, %p219
      %s222 = sadd.s32 %s221, 1
      %p225 = scmp.eq.s32.totalorder %s26, 1
      %p226 = scmp.ne.s32.totalorder %s221, %s223
      %p227 = scmp.eq.s32.totalorder %s26, 0
      %p228 = por %p226, %p227
      %p229 = scmp.ne.s32.totalorder %s221, %s223
      %p230 = scmp.eq.s32.totalorder %s31, 1
      %p231 = por %p229, %p230
      %p232 = scmp.ne.s32.totalorder %s223, %s224
      %p233 = scmp.eq.s32.totalorder %s31, 0
      %p234 = por %p232, %p233
      %p235 = scmp.ne.s32.totalorder %s223, %s224
      %p236 = scmp.eq.s32.totalorder %s32, 1
      %p237 = por %p235, %p236
      %p239 = scmp.ne.s32.totalorder %s224, %s238
      %p240 = scmp.eq.s32.totalorder %s32, 0
      %p241 = por %p239, %p240
      %s242 = ssub.s32 %s33, %s45
      %s243 = ssub.s32 %s34, %s41
      %s244 = sor.u32 %s242, %s243
      %p245 = scmp.eq.s32.totalorder %s244, 0
      %s247 = sadd.s32 %s246, 1
      %s248 = scalar_select %p245, %s246, %s247
      %p251 = pneg %p245
      %p252 = scmp.eq.s32.totalorder %s26, 1
      %p253 = por %p251, %p252
      %p254 = scmp.ne.s32.totalorder %s246, %s249
      %p255 = scmp.eq.s32.totalorder %s26, 0
      %p256 = por %p254, %p255
      %p257 = scmp.ne.s32.totalorder %s246, %s249
      %p258 = scmp.eq.s32.totalorder %s31, 1
      %p259 = por %p257, %p258
      %p260 = scmp.ne.s32.totalorder %s249, %s250
      %p261 = scmp.eq.s32.totalorder %s31, 0
      %p262 = por %p260, %p261
      %p263 = scmp.ne.s32.totalorder %s249, %s250
      %p264 = scmp.eq.s32.totalorder %s32, 1
      %p265 = por %p263, %p264
      %p267 = scmp.ne.s32.totalorder %s250, %s266
      %p268 = scmp.eq.s32.totalorder %s32, 0
      %p269 = por %p267, %p268
      %p270 = scmp.le.s32.totalorder 1, %s26
      %p271 = scmp.lt.s32.totalorder %s26, 3
      %p272 = pnand %p270, %p271
      %p273 = pneg %p272
      // Predicated region
      $region9: #{tpu_custom_call.1} parent=5 // pred_check
        _
      $region10: #{tpu_custom_call.1} parent=5 // pred_check_branch
        %275 = sbr.rel (%p272) target = $region12
      $region11: #{tpu_custom_call.1} parent=5 // pred_region
        %s276 = ssub.s32 %s26, 1
        // Predicated region
        $region13: #{tpu_custom_call.1} parent=11 // pred_check
          %p277 = pneg %p171
        $region14: #{tpu_custom_call.1} parent=11 // pred_check_branch
          %279 = sbr.rel (%p277) target = $region16
        $region15: #{tpu_custom_call.1} parent=11 // pred_region
          _
        $region16: #{tpu_custom_call.1} parent=11 // pred_fallthru
          _
        // Predicated region
        $region17: #{tpu_custom_call.1} parent=11 // pred_check
          %p280 = pneg %p192
        $region18: #{tpu_custom_call.1} parent=11 // pred_check_branch
          %282 = sbr.rel (%p280) target = $region20
        $region19: #{tpu_custom_call.1} parent=11 // pred_region
          _
        $region20: #{tpu_custom_call.1} parent=11 // pred_fallthru
          _
        // Predicated region
        $region21: #{tpu_custom_call.1} parent=11 // pred_check
          %p283 = pneg %p213
        $region22: #{tpu_custom_call.1} parent=11 // pred_check_branch
          %285 = sbr.rel (%p283) target = $region24
        $region23: #{tpu_custom_call.1} parent=11 // pred_region
          _
        $region24: #{tpu_custom_call.1} parent=11 // pred_fallthru
          _
        // Predicated region
        $region25: #{tpu_custom_call.1} parent=11 // pred_check
          %p286 = pneg %p234
        $region26: #{tpu_custom_call.1} parent=11 // pred_check_branch
          %288 = sbr.rel (%p286) target = $region28
        $region27: #{tpu_custom_call.1} parent=11 // pred_region
          %290 = vsyncadd [#allocation9], 0
          %s292 = sshll.u32 %s7, 4
          %s293 = int_to_ptr.hbm [resolvable:$true] %s292
          %s294 = sshll.u32 [#allocation10], 4
          %s295 = int_to_ptr.vmem [resolvable:$true] %s294
          %297 = dma.hbm_to_vmem [thread:$0]  %s293, 128, %s295, [#allocation9]
        $region28: #{tpu_custom_call.1} parent=11 // pred_fallthru
          _
      $region12: #{tpu_custom_call.1} parent=5 // pred_fallthru
        _
      %p298 = scmp.lt.s32.totalorder %s26, 2
      // Predicated region
      $region29: #{tpu_custom_call.1} parent=5 // pred_check
        %p299 = pneg %p298
      $region30: #{tpu_custom_call.1} parent=5 // pred_check_branch
        %301 = sbr.rel (%p299) target = $region32
      $region31: #{tpu_custom_call.1} parent=5 // pred_region
        // Predicated region
        $region33: #{tpu_custom_call.1} parent=31 // pred_check
          %p302 = pneg %p60
        $region34: #{tpu_custom_call.1} parent=31 // pred_check_branch
          %304 = sbr.rel (%p302) target = $region36
        $region35: #{tpu_custom_call.1} parent=31 // pred_region
          %s305 = sand.u32 %s50, 1
          %s306 = scalar_lea.sflag [#allocation3], %s305
          %s307 = sand.u32 %s50, 1
          %s308 = smul.addr %s307, 32
          %s309 = scalar_lea.vmem [#allocation2], %s308
          %s310 = smul.u32 8, %s34
          %312 = vsyncadd %s306, 0
          %s313 = smul.addr %s33, 8
          %s314 = sadd.s32 %s310, %s313
          %s315 = smul.addr %s314, 4
          %s316 = scalar_lea.hbm %s0, %s315
          %s318 = sshll.u32 %s316, 4
          %s319 = int_to_ptr.hbm [resolvable:$true] %s318
          %s320 = sshll.u32 %s309, 4
          %s321 = int_to_ptr.vmem [resolvable:$true] %s320
          %323 = dma.hbm_to_vmem [thread:$0]  %s319, 512, %s321, %s306
        $region36: #{tpu_custom_call.1} parent=31 // pred_fallthru
          _
        // Predicated region
        $region37: #{tpu_custom_call.1} parent=31 // pred_check
          %p324 = pneg %p88
        $region38: #{tpu_custom_call.1} parent=31 // pred_check_branch
          %326 = sbr.rel (%p324) target = $region40
        $region39: #{tpu_custom_call.1} parent=31 // pred_region
          %s327 = sand.u32 %s26, 1
          %s328 = scalar_lea.sflag [#allocation6], %s327
          %s329 = sand.u32 %s78, 1
          %s330 = smul.addr %s329, 64
          %s331 = scalar_lea.vmem [#allocation5], %s330
          %s332 = smul.u32 8, %s34
          %334 = vsyncadd %s328, 0
          %s335 = smul.addr %s33, 8
          %s336 = sadd.s32 %s332, %s335
          %s337 = smul.addr %s336, 8
          %s338 = scalar_lea.hbm %s1, %s337
          %s340 = sshll.u32 %s338, 4
          %s341 = int_to_ptr.hbm [resolvable:$true] %s340
          %s342 = sshll.u32 %s331, 4
          %s343 = int_to_ptr.vmem [resolvable:$true] %s342
          %345 = dma.hbm_to_vmem [thread:$0]  %s341, 1024, %s343, %s328
        $region40: #{tpu_custom_call.1} parent=31 // pred_fallthru
          _
        // Predicated region
        $region41: #{tpu_custom_call.1} parent=31 // pred_check
          %p346 = pneg %p116
        $region42: #{tpu_custom_call.1} parent=31 // pred_check_branch
          %348 = sbr.rel (%p346) target = $region44
        $region43: #{tpu_custom_call.1} parent=31 // pred_region
          %s349 = sand.u32 %s26, 1
          %s350 = scalar_lea.sflag [#allocation6], %s349
          %s351 = sand.u32 %s106, 1
          %s352 = smul.addr %s351, 128
          %s353 = scalar_lea.vmem [#allocation7], %s352
          %s354 = smul.u32 8, %s34
          %356 = vsyncadd %s350, 0
          %s357 = smul.addr %s33, 16
          %s358 = sadd.s32 %s354, %s357
          %s359 = smul.addr %s358, 8
          %s360 = scalar_lea.hbm %s2, %s359
          %s361 = sshll.u32 %s360, 4
          %s362 = int_to_ptr.hbm [resolvable:$true] %s361
          %s363 = sshll.u32 %s353, 4
          %s364 = int_to_ptr.vmem [resolvable:$true] %s363
          %369 = dma.hbm_to_vmem [thread:$0]  %s362, 2048, %s364, %s350, 1024, 1024, 64
        $region44: #{tpu_custom_call.1} parent=31 // pred_fallthru
          _
        // Predicated region
        $region45: #{tpu_custom_call.1} parent=31 // pred_check
          %p370 = pneg %p144
        $region46: #{tpu_custom_call.1} parent=31 // pred_check_branch
          %372 = sbr.rel (%p370) target = $region48
        $region47: #{tpu_custom_call.1} parent=31 // pred_region
          %s373 = sand.u32 %s26, 1
          %s374 = scalar_lea.sflag [#allocation9], %s373
          %s375 = sand.u32 %s134, 1
          %s376 = smul.addr %s375, 256
          %s377 = scalar_lea.vmem [#allocation8], %s376
          %s378 = smul.u32 8, %s34
          %380 = vsyncadd %s374, 0
          %s381 = smul.addr %s33, 32
          %s382 = sadd.s32 %s378, %s381
          %s383 = smul.addr %s382, 8
          %s384 = scalar_lea.hbm %s3, %s383
          %s385 = sshll.u32 %s384, 4
          %s386 = int_to_ptr.hbm [resolvable:$true] %s385
          %s387 = sshll.u32 %s377, 4
          %s388 = int_to_ptr.vmem [resolvable:$true] %s387
          %393 = dma.hbm_to_vmem [thread:$0]  %s386, 4096, %s388, %s374, 1024, 1024, 64
        $region48: #{tpu_custom_call.1} parent=31 // pred_fallthru
          _
      $region32: #{tpu_custom_call.1} parent=5 // pred_fallthru
        _
      %p394 = scmp.le.s32.totalorder 1, %s26
      %p395 = scmp.lt.s32.totalorder %s26, 3
      %p396 = pnand %p394, %p395
      %p397 = pneg %p396
      // Predicated region
      $region49: #{tpu_custom_call.1} parent=5 // pred_check
        _
      $region50: #{tpu_custom_call.1} parent=5 // pred_check_branch
        %399 = sbr.rel (%p396) target = $region52
      $region51: #{tpu_custom_call.1} parent=5 // pred_region
        %s400 = ssub.s32 %s26, 1
        %s401 = sand.u32 %s53, 1
        %s402 = scalar_lea.sflag [#allocation3], %s401
        %s403 = sand.u32 %s53, 1
        %s404 = smul.addr %s403, 32
        %s405 = scalar_lea.vmem [#allocation2], %s404
        // Predicated region
        $region53: #{tpu_custom_call.1} parent=51 // pred_check
          %p406 = pneg %p66
        $region54: #{tpu_custom_call.1} parent=51 // pred_check_branch
          %408 = sbr.rel (%p406) target = $region56
        $region55: #{tpu_custom_call.1} parent=51 // pred_region
          %410 = dma.done %s402, 512
        $region56: #{tpu_custom_call.1} parent=51 // pred_fallthru
          _
        %s411 = sand.u32 %s31, 1
        %s412 = scalar_lea.sflag [#allocation6], %s411
        %s413 = sand.u32 %s81, 1
        %s414 = smul.addr %s413, 64
        %s415 = scalar_lea.vmem [#allocation5], %s414
        // Predicated region
        $region57: #{tpu_custom_call.1} parent=51 // pred_check
          %p416 = pneg %p94
        $region58: #{tpu_custom_call.1} parent=51 // pred_check_branch
          %418 = sbr.rel (%p416) target = $region60
        $region59: #{tpu_custom_call.1} parent=51 // pred_region
          %420 = dma.done %s412, 1024
        $region60: #{tpu_custom_call.1} parent=51 // pred_fallthru
          _
        %s421 = sand.u32 %s31, 1
        %s422 = scalar_lea.sflag [#allocation6], %s421
        %s423 = sand.u32 %s109, 1
        %s424 = smul.addr %s423, 128
        %s425 = scalar_lea.vmem [#allocation7], %s424
        // Predicated region
        $region61: #{tpu_custom_call.1} parent=51 // pred_check
          %p426 = pneg %p122
        $region62: #{tpu_custom_call.1} parent=51 // pred_check_branch
          %428 = sbr.rel (%p426) target = $region64
        $region63: #{tpu_custom_call.1} parent=51 // pred_region
          %430 = dma.done %s422, 2048
        $region64: #{tpu_custom_call.1} parent=51 // pred_fallthru
          _
        %s431 = sand.u32 %s31, 1
        %s432 = scalar_lea.sflag [#allocation9], %s431
        %s433 = sand.u32 %s137, 1
        %s434 = smul.addr %s433, 256
        %s435 = scalar_lea.vmem [#allocation8], %s434
        // Predicated region
        $region65: #{tpu_custom_call.1} parent=51 // pred_check
          %p436 = pneg %p150
        $region66: #{tpu_custom_call.1} parent=51 // pred_check_branch
          %438 = sbr.rel (%p436) target = $region68
        $region67: #{tpu_custom_call.1} parent=51 // pred_region
          %440 = dma.done %s432, 4096
        $region68: #{tpu_custom_call.1} parent=51 // pred_fallthru
          _
        // Predicated region
        $region69: #{tpu_custom_call.1} parent=51 // pred_check
          %p441 = pneg %p234
        $region70: #{tpu_custom_call.1} parent=51 // pred_check_branch
          %443 = sbr.rel (%p441) target = $region72
        $region71: #{tpu_custom_call.1} parent=51 // pred_region
          %445 = dma.done [#allocation9], 128
        $region72: #{tpu_custom_call.1} parent=51 // pred_fallthru
          _
        %s446 = sand.u32 %s53, 1
        %s447 = scalar_lea.sflag [#allocation3], %s446
        %s448 = sand.u32 %s53, 1
        %s449 = smul.addr %s448, 32
        %s450 = scalar_lea.vmem [#allocation2], %s449
        %p451 = pneg %p66
        %p452 = pneg %p63
        %s453 = sand.u32 %s31, 1
        %s454 = scalar_lea.sflag [#allocation6], %s453
        %s455 = sand.u32 %s81, 1
        %s456 = smul.addr %s455, 64
        %s457 = scalar_lea.vmem [#allocation5], %s456
        %p458 = pneg %p94
        %p459 = pneg %p91
        %s460 = sand.u32 %s31, 1
        %s461 = scalar_lea.sflag [#allocation6], %s460
        %s462 = sand.u32 %s109, 1
        %s463 = smul.addr %s462, 128
        %s464 = scalar_lea.vmem [#allocation7], %s463
        %p465 = pneg %p122
        %p466 = pneg %p119
        %s467 = sand.u32 %s31, 1
        %s468 = scalar_lea.sflag [#allocation9], %s467
        %s469 = sand.u32 %s137, 1
        %s470 = smul.addr %s469, 256
        %s471 = scalar_lea.vmem [#allocation8], %s470
        %p472 = pneg %p150
        %p473 = pneg %p147
        %p474 = pneg %p171
        %p475 = pneg %p168
        %p476 = pneg %p192
        %p477 = pneg %p189
        %p478 = pneg %p213
        %p479 = pneg %p210
        %p480 = pneg %p234
        %p481 = pneg %p231
        %p482 = pneg %p262
        %p483 = pneg %p259
        %s484 = sand.u32 %s249, 1
        %s485 = scalar_lea.sflag [#allocation4], %s484
        %s486 = sand.u32 %s249, 1
        %s487 = smul.addr %s486, 64
        %s488 = scalar_lea.vmem [#allocation11], %s487
        %s489 = smul.u32 8, %s36
        %s490 = smul.u32 8, %s36
        %s491 = smul.u32 8, %s36
        %s492 = smul.u32 8, %s36
        %s493 = smul.u32 8, %s36
        %v494 = vld [vmem:[%s4] sm:$0xff]
        %v495 = vld [vmem:[%s405] sm:$0xff]
        %v496 = vld [vmem:[%s405 + $0x8] sm:$0xff]
        %v497 = vld [vmem:[%s405 + $0x10] sm:$0xff]
        %v498 = vld [vmem:[%s405 + $0x18] sm:$0xff]
        %v499 = vld [vmem:[%s5] sm:$0xff]
        %v500 = vld [vmem:[%s415] sm:$0xff]
        %v501 = vld [vmem:[%s415 + $0x8] sm:$0xff]
        %v502 = vld [vmem:[%s415 + $0x10] sm:$0xff]
        %v503 = vld [vmem:[%s415 + $0x18] sm:$0xff]
        %v504 = vld [vmem:[%s415 + $0x20] sm:$0xff]
        %v505 = vld [vmem:[%s415 + $0x28] sm:$0xff]
        %v506 = vld [vmem:[%s415 + $0x30] sm:$0xff]
        %v507 = vld [vmem:[%s415 + $0x38] sm:$0xff]
        %vm508 = vcmask 64512
        %v510 = vsel %vm508, %v499, 0
        %512 = vmatpush.msra.mxu0 0.0
        %513 = vmatpush.msra.mxu0 0.0
        %514 = vmatpush.msra.mxu0 0.0
        %515 = vmatpush.msra.mxu0 0.0
        %516 = vmatpush.msra.mxu0 0.0
        %517 = vmatpush.msra.mxu0 0.0
        %518 = vmatpush.msra.mxu0 0.0
        %519 = vmatpush.msra.mxu0 0.0
        %520 = vmatpush.msra.mxu0 0.0
        %521 = vmatpush.msra.mxu0 0.0
        %522 = vmatpush.msra.mxu0 0.0
        %523 = vmatpush.msra.mxu0 0.0
        %524 = vmatpush.msra.mxu0 0.0
        %525 = vmatpush.msra.mxu0 0.0
        %526 = vmatpush.msra.mxu0 0.0
        %527 = vmatpush.msra.mxu0 %v500
        %528 = vmatmul.f32.gmra.mxu0 %v510
        %v529 = vpop.f32.mrf.mxu0
        %v530 = vadd.f32 0.0, %v529
        %531 = vdwg.mxu0
        %532 = vmatpush.msra.mxu0 0.0
        %533 = vmatpush.msra.mxu0 0.0
        %534 = vmatpush.msra.mxu0 0.0
        %535 = vmatpush.msra.mxu0 0.0
        %536 = vmatpush.msra.mxu0 0.0
        %537 = vmatpush.msra.mxu0 0.0
        %538 = vmatpush.msra.mxu0 0.0
        %539 = vmatpush.msra.mxu0 0.0
        %540 = vmatpush.msra.mxu0 0.0
        %541 = vmatpush.msra.mxu0 0.0
        %542 = vmatpush.msra.mxu0 0.0
        %543 = vmatpush.msra.mxu0 0.0
        %544 = vmatpush.msra.mxu0 0.0
        %545 = vmatpush.msra.mxu0 0.0
        %546 = vmatpush.msra.mxu0 0.0
        %547 = vmatpush.msra.mxu0 %v501
        %548 = vmatmul.f32.gmra.mxu0 %v510
        %v549 = vpop.f32.mrf.mxu0
        %v550 = vadd.f32 0.0, %v549
        %551 = vdwg.mxu0
        %552 = vmatpush.msra.mxu0 0.0
        %553 = vmatpush.msra.mxu0 0.0
        %554 = vmatpush.msra.mxu0 0.0
        %555 = vmatpush.msra.mxu0 0.0
        %556 = vmatpush.msra.mxu0 0.0
        %557 = vmatpush.msra.mxu0 0.0
        %558 = vmatpush.msra.mxu0 0.0
        %559 = vmatpush.msra.mxu0 0.0
        %560 = vmatpush.msra.mxu0 0.0
        %561 = vmatpush.msra.mxu0 0.0
        %562 = vmatpush.msra.mxu0 0.0
        %563 = vmatpush.msra.mxu0 0.0
        %564 = vmatpush.msra.mxu0 0.0
        %565 = vmatpush.msra.mxu0 0.0
        %566 = vmatpush.msra.mxu0 0.0
        %567 = vmatpush.msra.mxu0 %v502
        %568 = vmatmul.f32.gmra.mxu0 %v510
        %v569 = vpop.f32.mrf.mxu0
        %v570 = vadd.f32 0.0, %v569
        %571 = vdwg.mxu0
        %572 = vmatpush.msra.mxu0 0.0
        %573 = vmatpush.msra.mxu0 0.0
        %574 = vmatpush.msra.mxu0 0.0
        %575 = vmatpush.msra.mxu0 0.0
        %576 = vmatpush.msra.mxu0 0.0
        %577 = vmatpush.msra.mxu0 0.0
        %578 = vmatpush.msra.mxu0 0.0
        %579 = vmatpush.msra.mxu0 0.0
        %580 = vmatpush.msra.mxu0 0.0
        %581 = vmatpush.msra.mxu0 0.0
        %582 = vmatpush.msra.mxu0 0.0
        %583 = vmatpush.msra.mxu0 0.0
        %584 = vmatpush.msra.mxu0 0.0
        %585 = vmatpush.msra.mxu0 0.0
        %586 = vmatpush.msra.mxu0 0.0
        %587 = vmatpush.msra.mxu0 %v503
        %588 = vmatmul.f32.gmra.mxu0 %v510
        %v589 = vpop.f32.mrf.mxu0
        %v590 = vadd.f32 0.0, %v589
        %591 = vdwg.mxu0
        %592 = vmatpush.msra.mxu0 0.0
        %593 = vmatpush.msra.mxu0 0.0
        %594 = vmatpush.msra.mxu0 0.0
        %595 = vmatpush.msra.mxu0 0.0
        %596 = vmatpush.msra.mxu0 0.0
        %597 = vmatpush.msra.mxu0 0.0
        %598 = vmatpush.msra.mxu0 0.0
        %599 = vmatpush.msra.mxu0 0.0
        %600 = vmatpush.msra.mxu0 0.0
        %601 = vmatpush.msra.mxu0 0.0
        %602 = vmatpush.msra.mxu0 0.0
        %603 = vmatpush.msra.mxu0 0.0
        %604 = vmatpush.msra.mxu0 0.0
        %605 = vmatpush.msra.mxu0 0.0
        %606 = vmatpush.msra.mxu0 0.0
        %607 = vmatpush.msra.mxu0 %v504
        %608 = vmatmul.f32.gmra.mxu0 %v510
        %v609 = vpop.f32.mrf.mxu0
        %v610 = vadd.f32 0.0, %v609
        %611 = vdwg.mxu0
        %612 = vmatpush.msra.mxu0 0.0
        %613 = vmatpush.msra.mxu0 0.0
        %614 = vmatpush.msra.mxu0 0.0
        %615 = vmatpush.msra.mxu0 0.0
        %616 = vmatpush.msra.mxu0 0.0
        %617 = vmatpush.msra.mxu0 0.0
        %618 = vmatpush.msra.mxu0 0.0
        %619 = vmatpush.msra.mxu0 0.0
        %620 = vmatpush.msra.mxu0 0.0
        %621 = vmatpush.msra.mxu0 0.0
        %622 = vmatpush.msra.mxu0 0.0
        %623 = vmatpush.msra.mxu0 0.0
        %624 = vmatpush.msra.mxu0 0.0
        %625 = vmatpush.msra.mxu0 0.0
        %626 = vmatpush.msra.mxu0 0.0
        %627 = vmatpush.msra.mxu0 %v505
        %628 = vmatmul.f32.gmra.mxu0 %v510
        %v629 = vpop.f32.mrf.mxu0
        %v630 = vadd.f32 0.0, %v629
        %631 = vdwg.mxu0
        %632 = vmatpush.msra.mxu0 0.0
        %633 = vmatpush.msra.mxu0 0.0
        %634 = vmatpush.msra.mxu0 0.0
        %635 = vmatpush.msra.mxu0 0.0
        %636 = vmatpush.msra.mxu0 0.0
        %637 = vmatpush.msra.mxu0 0.0
        %638 = vmatpush.msra.mxu0 0.0
        %639 = vmatpush.msra.mxu0 0.0
        %640 = vmatpush.msra.mxu0 0.0
        %641 = vmatpush.msra.mxu0 0.0
        %642 = vmatpush.msra.mxu0 0.0
        %643 = vmatpush.msra.mxu0 0.0
        %644 = vmatpush.msra.mxu0 0.0
        %645 = vmatpush.msra.mxu0 0.0
        %646 = vmatpush.msra.mxu0 0.0
        %647 = vmatpush.msra.mxu0 %v506
        %648 = vmatmul.f32.gmra.mxu0 %v510
        %v649 = vpop.f32.mrf.mxu0
        %v650 = vadd.f32 0.0, %v649
        %651 = vdwg.mxu0
        %652 = vmatpush.msra.mxu0 0.0
        %653 = vmatpush.msra.mxu0 0.0
        %654 = vmatpush.msra.mxu0 0.0
        %655 = vmatpush.msra.mxu0 0.0
        %656 = vmatpush.msra.mxu0 0.0
        %657 = vmatpush.msra.mxu0 0.0
        %658 = vmatpush.msra.mxu0 0.0
        %659 = vmatpush.msra.mxu0 0.0
        %660 = vmatpush.msra.mxu0 0.0
        %661 = vmatpush.msra.mxu0 0.0
        %662 = vmatpush.msra.mxu0 0.0
        %663 = vmatpush.msra.mxu0 0.0
        %664 = vmatpush.msra.mxu0 0.0
        %665 = vmatpush.msra.mxu0 0.0
        %666 = vmatpush.msra.mxu0 0.0
        %667 = vmatpush.msra.mxu0 %v507
        %668 = vmatmul.f32.gmra.mxu0 %v510
        %v669 = vpop.f32.mrf.mxu0
        %v670 = vadd.f32 0.0, %v669
        %671 = vdwg.mxu0
        %676 = vst [vmem:[#allocation1] ss:$2 sm:$0xff] %v495
        %s677 = scalar_lea.vmem [#allocation1], 16
        %678 = vst [vmem:[%s677] ss:$2 sm:$0xff] %v496
        %s679 = scalar_lea.vmem [#allocation1], 32
        %680 = vst [vmem:[%s679] ss:$2 sm:$0xff] %v497
        %s681 = scalar_lea.vmem [#allocation1], 48
        %682 = vst [vmem:[%s681] ss:$2 sm:$0xff] %v498
        %v683 = vld.sshfl [vmem:[#allocation1] sm:$0xff pattern:$0x75316420]
        %v684 = vld.sshfl [vmem:[#allocation1 + $0x8] sm:$0xff pattern:$0x75316420]
        %v685 = vld.sshfl [vmem:[#allocation1 + $0x10] sm:$0xff pattern:$0x75316420]
        %v686 = vld.sshfl [vmem:[#allocation1 + $0x18] sm:$0xff pattern:$0x75316420]
        %v687 = vld.sshfl [vmem:[#allocation1 + $0x20] sm:$0xff pattern:$0x75316420]
        %v688 = vld.sshfl [vmem:[#allocation1 + $0x28] sm:$0xff pattern:$0x75316420]
        %v689 = vld.sshfl [vmem:[#allocation1 + $0x30] sm:$0xff pattern:$0x75316420]
        %v690 = vld.sshfl [vmem:[#allocation1 + $0x38] sm:$0xff pattern:$0x75316420]
        %vm691 = vcmask 31744
        %v693 = vsel %vm691, %v494, 0
        %vm695 = vcmask 1043456
        %v696 = vsel %vm695, %v683, 0
        %v698 = vsel %vm695, %v684, 0
        %v700 = vsel %vm695, %v685, 0
        %v702 = vsel %vm695, %v686, 0
        %v704 = vsel %vm695, %v687, 0
        %v706 = vsel %vm695, %v688, 0
        %v708 = vsel %vm695, %v689, 0
        %v710 = vsel %vm695, %v690, 0
        %712 = vmatpush.msra.mxu0 0.0
        %713 = vmatpush.msra.mxu0 0.0
        %714 = vmatpush.msra.mxu0 0.0
        %715 = vmatpush.msra.mxu0 0.0
        %716 = vmatpush.msra.mxu0 0.0
        %717 = vmatpush.msra.mxu0 0.0
        %718 = vmatpush.msra.mxu0 0.0
        %719 = vmatpush.msra.mxu0 0.0
        %720 = vmatpush.msra.mxu0 0.0
        %721 = vmatpush.msra.mxu0 0.0
        %722 = vmatpush.msra.mxu0 0.0
        %723 = vmatpush.msra.mxu0 0.0
        %724 = vmatpush.msra.mxu0 0.0
        %725 = vmatpush.msra.mxu0 0.0
        %726 = vmatpush.msra.mxu0 0.0
        %727 = vmatpush.msra.mxu0 %v696
        %728 = vmatmul.f32.gmra.mxu0 %v693
        %v729 = vpop.f32.mrf.mxu0
        %v730 = vadd.f32 %v530, %v729
        %731 = vdwg.mxu0
        %732 = vmatpush.msra.mxu0 0.0
        %733 = vmatpush.msra.mxu0 0.0
        %734 = vmatpush.msra.mxu0 0.0
        %735 = vmatpush.msra.mxu0 0.0
        %736 = vmatpush.msra.mxu0 0.0
        %737 = vmatpush.msra.mxu0 0.0
        %738 = vmatpush.msra.mxu0 0.0
        %739 = vmatpush.msra.mxu0 0.0
        %740 = vmatpush.msra.mxu0 0.0
        %741 = vmatpush.msra.mxu0 0.0
        %742 = vmatpush.msra.mxu0 0.0
        %743 = vmatpush.msra.mxu0 0.0
        %744 = vmatpush.msra.mxu0 0.0
        %745 = vmatpush.msra.mxu0 0.0
        %746 = vmatpush.msra.mxu0 0.0
        %747 = vmatpush.msra.mxu0 %v698
        %748 = vmatmul.f32.gmra.mxu0 %v693
        %v749 = vpop.f32.mrf.mxu0
        %v750 = vadd.f32 %v550, %v749
        %751 = vdwg.mxu0
        %752 = vmatpush.msra.mxu0 0.0
        %753 = vmatpush.msra.mxu0 0.0
        %754 = vmatpush.msra.mxu0 0.0
        %755 = vmatpush.msra.mxu0 0.0
        %756 = vmatpush.msra.mxu0 0.0
        %757 = vmatpush.msra.mxu0 0.0
        %758 = vmatpush.msra.mxu0 0.0
        %759 = vmatpush.msra.mxu0 0.0
        %760 = vmatpush.msra.mxu0 0.0
        %761 = vmatpush.msra.mxu0 0.0
        %762 = vmatpush.msra.mxu0 0.0
        %763 = vmatpush.msra.mxu0 0.0
        %764 = vmatpush.msra.mxu0 0.0
        %765 = vmatpush.msra.mxu0 0.0
        %766 = vmatpush.msra.mxu0 0.0
        %767 = vmatpush.msra.mxu0 %v700
        %768 = vmatmul.f32.gmra.mxu0 %v693
        %v769 = vpop.f32.mrf.mxu0
        %v770 = vadd.f32 %v570, %v769
        %771 = vdwg.mxu0
        %772 = vmatpush.msra.mxu0 0.0
        %773 = vmatpush.msra.mxu0 0.0
        %774 = vmatpush.msra.mxu0 0.0
        %775 = vmatpush.msra.mxu0 0.0
        %776 = vmatpush.msra.mxu0 0.0
        %777 = vmatpush.msra.mxu0 0.0
        %778 = vmatpush.msra.mxu0 0.0
        %779 = vmatpush.msra.mxu0 0.0
        %780 = vmatpush.msra.mxu0 0.0
        %781 = vmatpush.msra.mxu0 0.0
        %782 = vmatpush.msra.mxu0 0.0
        %783 = vmatpush.msra.mxu0 0.0
        %784 = vmatpush.msra.mxu0 0.0
        %785 = vmatpush.msra.mxu0 0.0
        %786 = vmatpush.msra.mxu0 0.0
        %787 = vmatpush.msra.mxu0 %v702
        %788 = vmatmul.f32.gmra.mxu0 %v693
        %v789 = vpop.f32.mrf.mxu0
        %v790 = vadd.f32 %v590, %v789
        %791 = vdwg.mxu0
        %792 = vmatpush.msra.mxu0 0.0
        %793 = vmatpush.msra.mxu0 0.0
        %794 = vmatpush.msra.mxu0 0.0
        %795 = vmatpush.msra.mxu0 0.0
        %796 = vmatpush.msra.mxu0 0.0
        %797 = vmatpush.msra.mxu0 0.0
        %798 = vmatpush.msra.mxu0 0.0
        %799 = vmatpush.msra.mxu0 0.0
        %800 = vmatpush.msra.mxu0 0.0
        %801 = vmatpush.msra.mxu0 0.0
        %802 = vmatpush.msra.mxu0 0.0
        %803 = vmatpush.msra.mxu0 0.0
        %804 = vmatpush.msra.mxu0 0.0
        %805 = vmatpush.msra.mxu0 0.0
        %806 = vmatpush.msra.mxu0 0.0
        %807 = vmatpush.msra.mxu0 %v704
        %808 = vmatmul.f32.gmra.mxu0 %v693
        %v809 = vpop.f32.mrf.mxu0
        %v810 = vadd.f32 %v610, %v809
        %811 = vdwg.mxu0
        %812 = vmatpush.msra.mxu0 0.0
        %813 = vmatpush.msra.mxu0 0.0
        %814 = vmatpush.msra.mxu0 0.0
        %815 = vmatpush.msra.mxu0 0.0
        %816 = vmatpush.msra.mxu0 0.0
        %817 = vmatpush.msra.mxu0 0.0
        %818 = vmatpush.msra.mxu0 0.0
        %819 = vmatpush.msra.mxu0 0.0
        %820 = vmatpush.msra.mxu0 0.0
        %821 = vmatpush.msra.mxu0 0.0
        %822 = vmatpush.msra.mxu0 0.0
        %823 = vmatpush.msra.mxu0 0.0
        %824 = vmatpush.msra.mxu0 0.0
        %825 = vmatpush.msra.mxu0 0.0
        %826 = vmatpush.msra.mxu0 0.0
        %827 = vmatpush.msra.mxu0 %v706
        %828 = vmatmul.f32.gmra.mxu0 %v693
        %v829 = vpop.f32.mrf.mxu0
        %v830 = vadd.f32 %v630, %v829
        %831 = vdwg.mxu0
        %832 = vmatpush.msra.mxu0 0.0
        %833 = vmatpush.msra.mxu0 0.0
        %834 = vmatpush.msra.mxu0 0.0
        %835 = vmatpush.msra.mxu0 0.0
        %836 = vmatpush.msra.mxu0 0.0
        %837 = vmatpush.msra.mxu0 0.0
        %838 = vmatpush.msra.mxu0 0.0
        %839 = vmatpush.msra.mxu0 0.0
        %840 = vmatpush.msra.mxu0 0.0
        %841 = vmatpush.msra.mxu0 0.0
        %842 = vmatpush.msra.mxu0 0.0
        %843 = vmatpush.msra.mxu0 0.0
        %844 = vmatpush.msra.mxu0 0.0
        %845 = vmatpush.msra.mxu0 0.0
        %846 = vmatpush.msra.mxu0 0.0
        %847 = vmatpush.msra.mxu0 %v708
        %848 = vmatmul.f32.gmra.mxu0 %v693
        %v849 = vpop.f32.mrf.mxu0
        %v850 = vadd.f32 %v650, %v849
        %851 = vdwg.mxu0
        %852 = vmatpush.msra.mxu0 0.0
        %853 = vmatpush.msra.mxu0 0.0
        %854 = vmatpush.msra.mxu0 0.0
        %855 = vmatpush.msra.mxu0 0.0
        %856 = vmatpush.msra.mxu0 0.0
        %857 = vmatpush.msra.mxu0 0.0
        %858 = vmatpush.msra.mxu0 0.0
        %859 = vmatpush.msra.mxu0 0.0
        %860 = vmatpush.msra.mxu0 0.0
        %861 = vmatpush.msra.mxu0 0.0
        %862 = vmatpush.msra.mxu0 0.0
        %863 = vmatpush.msra.mxu0 0.0
        %864 = vmatpush.msra.mxu0 0.0
        %865 = vmatpush.msra.mxu0 0.0
        %866 = vmatpush.msra.mxu0 0.0
        %867 = vmatpush.msra.mxu0 %v710
        %868 = vmatmul.f32.gmra.mxu0 %v693
        %v869 = vpop.f32.mrf.mxu0
        %v870 = vadd.f32 %v670, %v869
        %871 = vdwg.mxu0
        %v872 = vld [vmem:[%s6] sm:$0xff]
        %v873 = vld [vmem:[%s425] sm:$0xff]
        %v874 = vld [vmem:[%s425 + $0x8] sm:$0xff]
        %v875 = vld [vmem:[%s425 + $0x10] sm:$0xff]
        %v876 = vld [vmem:[%s425 + $0x18] sm:$0xff]
        %v877 = vld [vmem:[%s425 + $0x20] sm:$0xff]
        %v878 = vld [vmem:[%s425 + $0x28] sm:$0xff]
        %v879 = vld [vmem:[%s425 + $0x30] sm:$0xff]
        %v880 = vld [vmem:[%s425 + $0x38] sm:$0xff]
        %v881 = vld [vmem:[%s425 + $0x40] sm:$0xff]
        %v882 = vld [vmem:[%s425 + $0x48] sm:$0xff]
        %v883 = vld [vmem:[%s425 + $0x50] sm:$0xff]
        %v884 = vld [vmem:[%s425 + $0x58] sm:$0xff]
        %v885 = vld [vmem:[%s425 + $0x60] sm:$0xff]
        %v886 = vld [vmem:[%s425 + $0x68] sm:$0xff]
        %v887 = vld [vmem:[%s425 + $0x70] sm:$0xff]
        %v888 = vld [vmem:[%s425 + $0x78] sm:$0xff]
        %vm889 = vcmask 130048
        %v891 = vsel %vm889, %v872, 0
        %893 = vmatpush.msra.mxu0 0.0
        %894 = vmatpush.msra.mxu0 0.0
        %895 = vmatpush.msra.mxu0 0.0
        %896 = vmatpush.msra.mxu0 0.0
        %897 = vmatpush.msra.mxu0 0.0
        %898 = vmatpush.msra.mxu0 0.0
        %899 = vmatpush.msra.mxu0 0.0
        %900 = vmatpush.msra.mxu0 0.0
        %901 = vmatpush.msra.mxu0 0.0
        %902 = vmatpush.msra.mxu0 0.0
        %903 = vmatpush.msra.mxu0 0.0
        %904 = vmatpush.msra.mxu0 0.0
        %905 = vmatpush.msra.mxu0 0.0
        %906 = vmatpush.msra.mxu0 0.0
        %907 = vmatpush.msra.mxu0 %v881
        %908 = vmatpush.msra.mxu0 %v873
        %909 = vmatmul.f32.gmra.mxu0 %v891
        %v910 = vpop.f32.mrf.mxu0
        %v911 = vadd.f32 0.0, %v910
        %912 = vdwg.mxu0
        %913 = vmatpush.msra.mxu0 0.0
        %914 = vmatpush.msra.mxu0 0.0
        %915 = vmatpush.msra.mxu0 0.0
        %916 = vmatpush.msra.mxu0 0.0
        %917 = vmatpush.msra.mxu0 0.0
        %918 = vmatpush.msra.mxu0 0.0
        %919 = vmatpush.msra.mxu0 0.0
        %920 = vmatpush.msra.mxu0 0.0
        %921 = vmatpush.msra.mxu0 0.0
        %922 = vmatpush.msra.mxu0 0.0
        %923 = vmatpush.msra.mxu0 0.0
        %924 = vmatpush.msra.mxu0 0.0
        %925 = vmatpush.msra.mxu0 0.0
        %926 = vmatpush.msra.mxu0 0.0
        %927 = vmatpush.msra.mxu0 %v882
        %928 = vmatpush.msra.mxu0 %v874
        %929 = vmatmul.f32.gmra.mxu0 %v891
        %v930 = vpop.f32.mrf.mxu0
        %v931 = vadd.f32 0.0, %v930
        %932 = vdwg.mxu0
        %933 = vmatpush.msra.mxu0 0.0
        %934 = vmatpush.msra.mxu0 0.0
        %935 = vmatpush.msra.mxu0 0.0
        %936 = vmatpush.msra.mxu0 0.0
        %937 = vmatpush.msra.mxu0 0.0
        %938 = vmatpush.msra.mxu0 0.0
        %939 = vmatpush.msra.mxu0 0.0
        %940 = vmatpush.msra.mxu0 0.0
        %941 = vmatpush.msra.mxu0 0.0
        %942 = vmatpush.msra.mxu0 0.0
        %943 = vmatpush.msra.mxu0 0.0
        %944 = vmatpush.msra.mxu0 0.0
        %945 = vmatpush.msra.mxu0 0.0
        %946 = vmatpush.msra.mxu0 0.0
        %947 = vmatpush.msra.mxu0 %v883
        %948 = vmatpush.msra.mxu0 %v875
        %949 = vmatmul.f32.gmra.mxu0 %v891
        %v950 = vpop.f32.mrf.mxu0
        %v951 = vadd.f32 0.0, %v950
        %952 = vdwg.mxu0
        %953 = vmatpush.msra.mxu0 0.0
        %954 = vmatpush.msra.mxu0 0.0
        %955 = vmatpush.msra.mxu0 0.0
        %956 = vmatpush.msra.mxu0 0.0
        %957 = vmatpush.msra.mxu0 0.0
        %958 = vmatpush.msra.mxu0 0.0
        %959 = vmatpush.msra.mxu0 0.0
        %960 = vmatpush.msra.mxu0 0.0
        %961 = vmatpush.msra.mxu0 0.0
        %962 = vmatpush.msra.mxu0 0.0
        %963 = vmatpush.msra.mxu0 0.0
        %964 = vmatpush.msra.mxu0 0.0
        %965 = vmatpush.msra.mxu0 0.0
        %966 = vmatpush.msra.mxu0 0.0
        %967 = vmatpush.msra.mxu0 %v884
        %968 = vmatpush.msra.mxu0 %v876
        %969 = vmatmul.f32.gmra.mxu0 %v891
        %v970 = vpop.f32.mrf.mxu0
        %v971 = vadd.f32 0.0, %v970
        %972 = vdwg.mxu0
        %973 = vmatpush.msra.mxu0 0.0
        %974 = vmatpush.msra.mxu0 0.0
        %975 = vmatpush.msra.mxu0 0.0
        %976 = vmatpush.msra.mxu0 0.0
        %977 = vmatpush.msra.mxu0 0.0
        %978 = vmatpush.msra.mxu0 0.0
        %979 = vmatpush.msra.mxu0 0.0
        %980 = vmatpush.msra.mxu0 0.0
        %981 = vmatpush.msra.mxu0 0.0
        %982 = vmatpush.msra.mxu0 0.0
        %983 = vmatpush.msra.mxu0 0.0
        %984 = vmatpush.msra.mxu0 0.0
        %985 = vmatpush.msra.mxu0 0.0
        %986 = vmatpush.msra.mxu0 0.0
        %987 = vmatpush.msra.mxu0 %v885
        %988 = vmatpush.msra.mxu0 %v877
        %989 = vmatmul.f32.gmra.mxu0 %v891
        %v990 = vpop.f32.mrf.mxu0
        %v991 = vadd.f32 0.0, %v990
        %992 = vdwg.mxu0
        %993 = vmatpush.msra.mxu0 0.0
        %994 = vmatpush.msra.mxu0 0.0
        %995 = vmatpush.msra.mxu0 0.0
        %996 = vmatpush.msra.mxu0 0.0
        %997 = vmatpush.msra.mxu0 0.0
        %998 = vmatpush.msra.mxu0 0.0
        %999 = vmatpush.msra.mxu0 0.0
        %1000 = vmatpush.msra.mxu0 0.0
        %1001 = vmatpush.msra.mxu0 0.0
        %1002 = vmatpush.msra.mxu0 0.0
        %1003 = vmatpush.msra.mxu0 0.0
        %1004 = vmatpush.msra.mxu0 0.0
        %1005 = vmatpush.msra.mxu0 0.0
        %1006 = vmatpush.msra.mxu0 0.0
        %1007 = vmatpush.msra.mxu0 %v886
        %1008 = vmatpush.msra.mxu0 %v878
        %1009 = vmatmul.f32.gmra.mxu0 %v891
        %v1010 = vpop.f32.mrf.mxu0
        %v1011 = vadd.f32 0.0, %v1010
        %1012 = vdwg.mxu0
        %1013 = vmatpush.msra.mxu0 0.0
        %1014 = vmatpush.msra.mxu0 0.0
        %1015 = vmatpush.msra.mxu0 0.0
        %1016 = vmatpush.msra.mxu0 0.0
        %1017 = vmatpush.msra.mxu0 0.0
        %1018 = vmatpush.msra.mxu0 0.0
        %1019 = vmatpush.msra.mxu0 0.0
        %1020 = vmatpush.msra.mxu0 0.0
        %1021 = vmatpush.msra.mxu0 0.0
        %1022 = vmatpush.msra.mxu0 0.0
        %1023 = vmatpush.msra.mxu0 0.0
        %1024 = vmatpush.msra.mxu0 0.0
        %1025 = vmatpush.msra.mxu0 0.0
        %1026 = vmatpush.msra.mxu0 0.0
        %1027 = vmatpush.msra.mxu0 %v887
        %1028 = vmatpush.msra.mxu0 %v879
        %1029 = vmatmul.f32.gmra.mxu0 %v891
        %v1030 = vpop.f32.mrf.mxu0
        %v1031 = vadd.f32 0.0, %v1030
        %1032 = vdwg.mxu0
        %1033 = vmatpush.msra.mxu0 0.0
        %1034 = vmatpush.msra.mxu0 0.0
        %1035 = vmatpush.msra.mxu0 0.0
        %1036 = vmatpush.msra.mxu0 0.0
        %1037 = vmatpush.msra.mxu0 0.0
        %1038 = vmatpush.msra.mxu0 0.0
        %1039 = vmatpush.msra.mxu0 0.0
        %1040 = vmatpush.msra.mxu0 0.0
        %1041 = vmatpush.msra.mxu0 0.0
        %1042 = vmatpush.msra.mxu0 0.0
        %1043 = vmatpush.msra.mxu0 0.0
        %1044 = vmatpush.msra.mxu0 0.0
        %1045 = vmatpush.msra.mxu0 0.0
        %1046 = vmatpush.msra.mxu0 0.0
        %1047 = vmatpush.msra.mxu0 %v888
        %1048 = vmatpush.msra.mxu0 %v880
        %1049 = vmatmul.f32.gmra.mxu0 %v891
        %v1050 = vpop.f32.mrf.mxu0
        %v1051 = vadd.f32 0.0, %v1050
        %1052 = vdwg.mxu0
        %v1053 = vadd.f32 %v730, %v911
        %v1054 = vadd.f32 %v750, %v931
        %v1055 = vadd.f32 %v770, %v951
        %v1056 = vadd.f32 %v790, %v971
        %v1057 = vadd.f32 %v810, %v991
        %v1058 = vadd.f32 %v830, %v1011
        %v1059 = vadd.f32 %v850, %v1031
        %v1060 = vadd.f32 %v870, %v1051
        %v1061 = vld [vmem:[#allocation10] sm:$0xff]
        %v1062 = vld [vmem:[%s435] sm:$0xff]
        %v1063 = vld [vmem:[%s435 + $0x8] sm:$0xff]
        %v1064 = vld [vmem:[%s435 + $0x10] sm:$0xff]
        %v1065 = vld [vmem:[%s435 + $0x18] sm:$0xff]
        %v1066 = vld [vmem:[%s435 + $0x20] sm:$0xff]
        %v1067 = vld [vmem:[%s435 + $0x28] sm:$0xff]
        %v1068 = vld [vmem:[%s435 + $0x30] sm:$0xff]
        %v1069 = vld [vmem:[%s435 + $0x38] sm:$0xff]
        %v1070 = vld [vmem:[%s435 + $0x40] sm:$0xff]
        %v1071 = vld [vmem:[%s435 + $0x48] sm:$0xff]
        %v1072 = vld [vmem:[%s435 + $0x50] sm:$0xff]
        %v1073 = vld [vmem:[%s435 + $0x58] sm:$0xff]
        %v1074 = vld [vmem:[%s435 + $0x60] sm:$0xff]
        %v1075 = vld [vmem:[%s435 + $0x68] sm:$0xff]
        %v1076 = vld [vmem:[%s435 + $0x70] sm:$0xff]
        %v1077 = vld [vmem:[%s435 + $0x78] sm:$0xff]
        %v1078 = vld [vmem:[%s435 + $0x80] sm:$0xff]
        %v1079 = vld [vmem:[%s435 + $0x88] sm:$0xff]
        %v1080 = vld [vmem:[%s435 + $0x90] sm:$0xff]
        %v1081 = vld [vmem:[%s435 + $0x98] sm:$0xff]
        %v1082 = vld [vmem:[%s435 + $0xa0] sm:$0xff]
        %v1083 = vld [vmem:[%s435 + $0xa8] sm:$0xff]
        %v1084 = vld [vmem:[%s435 + $0xb0] sm:$0xff]
        %v1085 = vld [vmem:[%s435 + $0xb8] sm:$0xff]
        %v1086 = vld [vmem:[%s435 + $0xc0] sm:$0xff]
        %v1087 = vld [vmem:[%s435 + $0xc8] sm:$0xff]
        %v1088 = vld [vmem:[%s435 + $0xd0] sm:$0xff]
        %v1089 = vld [vmem:[%s435 + $0xd8] sm:$0xff]
        %v1090 = vld [vmem:[%s435 + $0xe0] sm:$0xff]
        %v1091 = vld [vmem:[%s435 + $0xe8] sm:$0xff]
        %v1092 = vld [vmem:[%s435 + $0xf0] sm:$0xff]
        %v1093 = vld [vmem:[%s435 + $0xf8] sm:$0xff]
        %vm1094 = vcmask 261120
        %v1096 = vsel %vm1094, %v1061, 0
        %1098 = vmatpush.msra.mxu0 0.0
        %1099 = vmatpush.msra.mxu0 0.0
        %1100 = vmatpush.msra.mxu0 0.0
        %1101 = vmatpush.msra.mxu0 0.0
        %1102 = vmatpush.msra.mxu0 0.0
        %1103 = vmatpush.msra.mxu0 0.0
        %1104 = vmatpush.msra.mxu0 0.0
        %1105 = vmatpush.msra.mxu0 0.0
        %1106 = vmatpush.msra.mxu0 0.0
        %1107 = vmatpush.msra.mxu0 0.0
        %1108 = vmatpush.msra.mxu0 0.0
        %1109 = vmatpush.msra.mxu0 0.0
        %1110 = vmatpush.msra.mxu0 %v1086
        %1111 = vmatpush.msra.mxu0 %v1078
        %1112 = vmatpush.msra.mxu0 %v1070
        %1113 = vmatpush.msra.mxu0 %v1062
        %1114 = vmatmul.f32.gmra.mxu0 %v1096
        %v1115 = vpop.f32.mrf.mxu0
        %v1116 = vadd.f32 0.0, %v1115
        %1117 = vdwg.mxu0
        %1118 = vmatpush.msra.mxu0 0.0
        %1119 = vmatpush.msra.mxu0 0.0
        %1120 = vmatpush.msra.mxu0 0.0
        %1121 = vmatpush.msra.mxu0 0.0
        %1122 = vmatpush.msra.mxu0 0.0
        %1123 = vmatpush.msra.mxu0 0.0
        %1124 = vmatpush.msra.mxu0 0.0
        %1125 = vmatpush.msra.mxu0 0.0
        %1126 = vmatpush.msra.mxu0 0.0
        %1127 = vmatpush.msra.mxu0 0.0
        %1128 = vmatpush.msra.mxu0 0.0
        %1129 = vmatpush.msra.mxu0 0.0
        %1130 = vmatpush.msra.mxu0 %v1087
        %1131 = vmatpush.msra.mxu0 %v1079
        %1132 = vmatpush.msra.mxu0 %v1071
        %1133 = vmatpush.msra.mxu0 %v1063
        %1134 = vmatmul.f32.gmra.mxu0 %v1096
        %v1135 = vpop.f32.mrf.mxu0
        %v1136 = vadd.f32 0.0, %v1135
        %1137 = vdwg.mxu0
        %1138 = vmatpush.msra.mxu0 0.0
        %1139 = vmatpush.msra.mxu0 0.0
        %1140 = vmatpush.msra.mxu0 0.0
        %1141 = vmatpush.msra.mxu0 0.0
        %1142 = vmatpush.msra.mxu0 0.0
        %1143 = vmatpush.msra.mxu0 0.0
        %1144 = vmatpush.msra.mxu0 0.0
        %1145 = vmatpush.msra.mxu0 0.0
        %1146 = vmatpush.msra.mxu0 0.0
        %1147 = vmatpush.msra.mxu0 0.0
        %1148 = vmatpush.msra.mxu0 0.0
        %1149 = vmatpush.msra.mxu0 0.0
        %1150 = vmatpush.msra.mxu0 %v1088
        %1151 = vmatpush.msra.mxu0 %v1080
        %1152 = vmatpush.msra.mxu0 %v1072
        %1153 = vmatpush.msra.mxu0 %v1064
        %1154 = vmatmul.f32.gmra.mxu0 %v1096
        %v1155 = vpop.f32.mrf.mxu0
        %v1156 = vadd.f32 0.0, %v1155
        %1157 = vdwg.mxu0
        %1158 = vmatpush.msra.mxu0 0.0
        %1159 = vmatpush.msra.mxu0 0.0
        %1160 = vmatpush.msra.mxu0 0.0
        %1161 = vmatpush.msra.mxu0 0.0
        %1162 = vmatpush.msra.mxu0 0.0
        %1163 = vmatpush.msra.mxu0 0.0
        %1164 = vmatpush.msra.mxu0 0.0
        %1165 = vmatpush.msra.mxu0 0.0
        %1166 = vmatpush.msra.mxu0 0.0
        %1167 = vmatpush.msra.mxu0 0.0
        %1168 = vmatpush.msra.mxu0 0.0
        %1169 = vmatpush.msra.mxu0 0.0
        %1170 = vmatpush.msra.mxu0 %v1089
        %1171 = vmatpush.msra.mxu0 %v1081
        %1172 = vmatpush.msra.mxu0 %v1073
        %1173 = vmatpush.msra.mxu0 %v1065
        %1174 = vmatmul.f32.gmra.mxu0 %v1096
        %v1175 = vpop.f32.mrf.mxu0
        %v1176 = vadd.f32 0.0, %v1175
        %1177 = vdwg.mxu0
        %1178 = vmatpush.msra.mxu0 0.0
        %1179 = vmatpush.msra.mxu0 0.0
        %1180 = vmatpush.msra.mxu0 0.0
        %1181 = vmatpush.msra.mxu0 0.0
        %1182 = vmatpush.msra.mxu0 0.0
        %1183 = vmatpush.msra.mxu0 0.0
        %1184 = vmatpush.msra.mxu0 0.0
        %1185 = vmatpush.msra.mxu0 0.0
        %1186 = vmatpush.msra.mxu0 0.0
        %1187 = vmatpush.msra.mxu0 0.0
        %1188 = vmatpush.msra.mxu0 0.0
        %1189 = vmatpush.msra.mxu0 0.0
        %1190 = vmatpush.msra.mxu0 %v1090
        %1191 = vmatpush.msra.mxu0 %v1082
        %1192 = vmatpush.msra.mxu0 %v1074
        %1193 = vmatpush.msra.mxu0 %v1066
        %1194 = vmatmul.f32.gmra.mxu0 %v1096
        %v1195 = vpop.f32.mrf.mxu0
        %v1196 = vadd.f32 0.0, %v1195
        %1197 = vdwg.mxu0
        %1198 = vmatpush.msra.mxu0 0.0
        %1199 = vmatpush.msra.mxu0 0.0
        %1200 = vmatpush.msra.mxu0 0.0
        %1201 = vmatpush.msra.mxu0 0.0
        %1202 = vmatpush.msra.mxu0 0.0
        %1203 = vmatpush.msra.mxu0 0.0
        %1204 = vmatpush.msra.mxu0 0.0
        %1205 = vmatpush.msra.mxu0 0.0
        %1206 = vmatpush.msra.mxu0 0.0
        %1207 = vmatpush.msra.mxu0 0.0
        %1208 = vmatpush.msra.mxu0 0.0
        %1209 = vmatpush.msra.mxu0 0.0
        %1210 = vmatpush.msra.mxu0 %v1091
        %1211 = vmatpush.msra.mxu0 %v1083
        %1212 = vmatpush.msra.mxu0 %v1075
        %1213 = vmatpush.msra.mxu0 %v1067
        %1214 = vmatmul.f32.gmra.mxu0 %v1096
        %v1215 = vpop.f32.mrf.mxu0
        %v1216 = vadd.f32 0.0, %v1215
        %1217 = vdwg.mxu0
        %1218 = vmatpush.msra.mxu0 0.0
        %1219 = vmatpush.msra.mxu0 0.0
        %1220 = vmatpush.msra.mxu0 0.0
        %1221 = vmatpush.msra.mxu0 0.0
        %1222 = vmatpush.msra.mxu0 0.0
        %1223 = vmatpush.msra.mxu0 0.0
        %1224 = vmatpush.msra.mxu0 0.0
        %1225 = vmatpush.msra.mxu0 0.0
        %1226 = vmatpush.msra.mxu0 0.0
        %1227 = vmatpush.msra.mxu0 0.0
        %1228 = vmatpush.msra.mxu0 0.0
        %1229 = vmatpush.msra.mxu0 0.0
        %1230 = vmatpush.msra.mxu0 %v1092
        %1231 = vmatpush.msra.mxu0 %v1084
        %1232 = vmatpush.msra.mxu0 %v1076
        %1233 = vmatpush.msra.mxu0 %v1068
        %1234 = vmatmul.f32.gmra.mxu0 %v1096
        %v1235 = vpop.f32.mrf.mxu0
        %v1236 = vadd.f32 0.0, %v1235
        %1237 = vdwg.mxu0
        %1238 = vmatpush.msra.mxu0 0.0
        %1239 = vmatpush.msra.mxu0 0.0
        %1240 = vmatpush.msra.mxu0 0.0
        %1241 = vmatpush.msra.mxu0 0.0
        %1242 = vmatpush.msra.mxu0 0.0
        %1243 = vmatpush.msra.mxu0 0.0
        %1244 = vmatpush.msra.mxu0 0.0
        %1245 = vmatpush.msra.mxu0 0.0
        %1246 = vmatpush.msra.mxu0 0.0
        %1247 = vmatpush.msra.mxu0 0.0
        %1248 = vmatpush.msra.mxu0 0.0
        %1249 = vmatpush.msra.mxu0 0.0
        %1250 = vmatpush.msra.mxu0 %v1093
        %1251 = vmatpush.msra.mxu0 %v1085
        %1252 = vmatpush.msra.mxu0 %v1077
        %1253 = vmatpush.msra.mxu0 %v1069
        %1254 = vmatmul.f32.gmra.mxu0 %v1096
        %v1255 = vpop.f32.mrf.mxu0
        %v1256 = vadd.f32 0.0, %v1255
        %1257 = vdwg.mxu0
        %v1258 = vadd.f32 %v1053, %v1116
        %v1259 = vadd.f32 %v1054, %v1136
        %v1260 = vadd.f32 %v1055, %v1156
        %v1261 = vadd.f32 %v1056, %v1176
        %v1262 = vadd.f32 %v1057, %v1196
        %v1263 = vadd.f32 %v1058, %v1216
        %v1264 = vadd.f32 %v1059, %v1236
        %v1265 = vadd.f32 %v1060, %v1256
        %1266 = vst [vmem:[%s488] sm:$0xff] %v1258
        %1267 = vst [vmem:[%s488 + $0x8] sm:$0xff] %v1259
        %1268 = vst [vmem:[%s488 + $0x10] sm:$0xff] %v1260
        %1269 = vst [vmem:[%s488 + $0x18] sm:$0xff] %v1261
        %1270 = vst [vmem:[%s488 + $0x20] sm:$0xff] %v1262
        %1271 = vst [vmem:[%s488 + $0x28] sm:$0xff] %v1263
        %1272 = vst [vmem:[%s488 + $0x30] sm:$0xff] %v1264
        %1273 = vst [vmem:[%s488 + $0x38] sm:$0xff] %v1265
        %s1274 = sand.u32 %s249, 1
        %s1275 = scalar_lea.sflag [#allocation4], %s1274
        %s1276 = sand.u32 %s249, 1
        %s1277 = smul.addr %s1276, 64
        %s1278 = scalar_lea.vmem [#allocation11], %s1277
        // Predicated region
        $region73: #{tpu_custom_call.1} parent=51 // pred_check
          %p1279 = pneg %p259
        $region74: #{tpu_custom_call.1} parent=51 // pred_check_branch
          %1281 = sbr.rel (%p1279) target = $region76
        $region75: #{tpu_custom_call.1} parent=51 // pred_region
          %s1282 = smul.u32 8, %s36
          %1284 = vsyncadd %s1275, 0
          %s1285 = smul.addr %s35, 8
          %s1286 = sadd.s32 %s1282, %s1285
          %s1287 = smul.addr %s1286, 8
          %s1288 = scalar_lea.hbm %s8, %s1287
          %s1290 = sshll.u32 %s1278, 4
          %s1291 = int_to_ptr.vmem [resolvable:$true] %s1290
          %s1292 = sshll.u32 %s1288, 4
          %s1293 = int_to_ptr.hbm [resolvable:$true] %s1292
          %1295 = dma.vmem_to_hbm [thread:$0]  %s1291, 1024, %s1293, %s1275
        $region76: #{tpu_custom_call.1} parent=51 // pred_fallthru
          _
      $region52: #{tpu_custom_call.1} parent=5 // pred_fallthru
        _
      %p1296 = scmp.le.s32.totalorder 2, %s26
      // Predicated region
      $region77: #{tpu_custom_call.1} parent=5 // pred_check
        %p1297 = pneg %p1296
      $region78: #{tpu_custom_call.1} parent=5 // pred_check_branch
        %1299 = sbr.rel (%p1297) target = $region80
      $region79: #{tpu_custom_call.1} parent=5 // pred_region
        %s1300 = ssub.s32 %s26, 2
        // Predicated region
        $region81: #{tpu_custom_call.1} parent=79 // pred_check
          %p1301 = pneg %p265
        $region82: #{tpu_custom_call.1} parent=79 // pred_check_branch
          %1303 = sbr.rel (%p1301) target = $region84
        $region83: #{tpu_custom_call.1} parent=79 // pred_region
          %s1304 = sand.u32 %s250, 1
          %s1305 = scalar_lea.sflag [#allocation4], %s1304
          %s1306 = sand.u32 %s250, 1
          %s1307 = smul.addr %s1306, 64
          %s1308 = scalar_lea.vmem [#allocation11], %s1307
          %1310 = dma.done %s1305, 1024
        $region84: #{tpu_custom_call.1} parent=79 // pred_fallthru
          _
      $region80: #{tpu_custom_call.1} parent=5 // pred_fallthru
        _
    $region6: #{tpu_custom_call.1} parent=1 // loop_footer
      %s30 = sadd.s32 1, %s26
    $region7: #{tpu_custom_call.1} parent=1 // loop_footer_branch
      %25 = sbr.rel target = $region3
    $region8: #{tpu_custom_call.1} parent=1 // loop_exit
      _
    %1311 = vsyncpa [#allocation3], 1
    %s1312 = scalar_lea.sflag [#allocation3], 1
    %1313 = vsyncpa %s1312, 1
    %1314 = vsyncpa [#allocation6], 1
    %s1315 = scalar_lea.sflag [#allocation6], 1
    %1316 = vsyncpa %s1315, 1
    %1317 = vsyncpa [#allocation9], 1
    %s1318 = scalar_lea.sflag [#allocation9], 1
    %1319 = vsyncpa %s1318, 1
    %1320 = vsyncpa [#allocation4], 1
    %s1321 = scalar_lea.sflag [#allocation4], 1
    %1322 = vsyncpa %s1321, 1

</llo_original>
